<compile_context>
chip_gen: v7x
topology: tpu7x:2x2x1
jax: 0.10.0
libtpu: 0.0.40
codegen_flags: <defaults>
</compile_context>

<pallas_src>
import functools

import jax
import jax.numpy as jnp
from jax.experimental import pallas as pl
from jax.experimental.pallas import tpu as pltpu


# -----------------------------------------------------------------------------
# Pallas kernel: fused 1x1-conv (channel-major matmul) + BN affine + ReLU
# -----------------------------------------------------------------------------
def _conv1x1_affine_act_kernel(x_ref, w_ref, pre_ref, scale_ref, shift_ref,
                               o_ref, *, post_affine):
    # x_ref:     (Cin, t)    spatial tile; spatial positions on the lane axis
    # w_ref:     (Cout, Cin) conv weight (BN scale pre-folded when norm_before)
    # pre_ref:   (Cout, 1)   added before the activation (BN shift / conv bias)
    # scale_ref: (Cout, 1)   post-activation scale (norm_before=False only)
    # shift_ref: (Cout, 1)   post-activation shift (norm_before=False only)
    # o_ref:     (Cout, t)
    x = x_ref[...].astype(w_ref.dtype)            # bf16 feed for the MXU
    y = jnp.dot(w_ref[...], x, preferred_element_type=jnp.float32)
    y = jnp.maximum(y + pre_ref[...], 0.0)
    if post_affine:                               # conv(+bias) -> relu -> BN
        y = y * scale_ref[...] + shift_ref[...]
    o_ref[...] = y.astype(o_ref.dtype)


def _choose_spatial_tile(hw, cin, cout, x_bytes, o_bytes, w_bytes,
                         vmem_budget=20 * 1024 * 1024, max_tile=2048):
    """Pick the spatial (lane) tile t. Returns (t, pad_cols)."""
    resident = cin * cout * w_bytes + 3 * cout * 4        # weight + channel vecs
    per_col = 2 * (cin * x_bytes + cout * o_bytes)        # double-buffered in/out
    cap = max(128, (vmem_budget - resident) // max(per_col, 1))
    cap = min(cap, max_tile)
    if hw <= cap:
        return hw, 0                                      # one full-width tile
    t = (cap // 128) * 128
    while t >= 128:                                       # mult-of-128 divisor
        if hw % t == 0:
            return t, 0
        t -= 128
    t = max((cap // 128) * 128, 128)                      # rare fallback: pad
    return t, (-hw) % t


def conv1x1_affine_act(x3, w, pre, scale, shift, *, post_affine, out_dtype):
    """x3: (N, Cin, HW); w: (Cout, Cin); pre/scale/shift: (Cout, 1)."""
    N, Cin, HW = x3.shape
    Cout = w.shape[0]
    x_bytes = jnp.dtype(x3.dtype).itemsize
    w_bytes = jnp.dtype(w.dtype).itemsize
    o_bytes = jnp.dtype(out_dtype).itemsize

    t, pad = _choose_spatial_tile(HW, Cin, Cout, x_bytes, o_bytes, w_bytes)
    if pad:
        x3 = jnp.pad(x3, ((0, 0), (0, 0), (0, pad)))
    HWp = HW + pad

    kernel = functools.partial(_conv1x1_affine_act_kernel,
                               post_affine=post_affine)
    vec_spec = pl.BlockSpec((Cout, 1), lambda n, i: (0, 0))

    out = pl.pallas_call(
        kernel,
        out_shape=jax.ShapeDtypeStruct((N, Cout, HWp), out_dtype),
        grid_spec=pltpu.PrefetchScalarGridSpec(
            num_scalar_prefetch=0,
            grid=(N, HWp // t),
            in_specs=[
                pl.BlockSpec((None, Cin, t), lambda n, i: (n, 0, i)),
                pl.BlockSpec((Cout, Cin), lambda n, i: (0, 0)),
                vec_spec, vec_spec, vec_spec,
            ],
            out_specs=pl.BlockSpec((None, Cout, t), lambda n, i: (n, 0, i)),
        ),
        compiler_params=pltpu.CompilerParams(
            dimension_semantics=("parallel", "parallel"),
            vmem_limit_bytes=32 * 1024 * 1024),
        cost_estimate=pl.CostEstimate(
            flops=2 * N * HWp * Cin * Cout,
            transcendentals=0,
            bytes_accessed=(N * Cin * HWp * x_bytes
                            + Cin * Cout * w_bytes
                            + N * Cout * HWp * o_bytes)),
    )(x3, w, pre, scale, shift)

    if pad:
        out = out[:, :, :HW]
    return out


# -----------------------------------------------------------------------------
# Module wrapper (parameters + glue)
# -----------------------------------------------------------------------------
class ResNetEndpointBlockPallas:
    def __init__(self, in_channels, out_channels, scale, key,
                 norm_before=True, eps=1e-5, compute_dtype=jnp.bfloat16):
        self.in_channels = in_channels
        self.out_channels = out_channels
        self.scale = scale
        self.norm_before = norm_before
        self.eps = eps
        self.compute_dtype = compute_dtype

        if in_channels != out_channels:
            k0, k1, k2, k3, k4 = jax.random.split(key, 5)
            # Conv2d 1x1 weight (Cout, Cin, 1, 1) -> stored channel-major
            # as (Cout, Cin); no transpose needed for the kernel.
            bound = 1.0 / float(in_channels) ** 0.5
            self.w = jax.random.uniform(k0, (out_channels, in_channels),
                                        minval=-bound, maxval=bound,
                                        dtype=jnp.float32)
            self.conv_bias = (
                jax.random.uniform(k1, (out_channels,), minval=-bound,
                                   maxval=bound, dtype=jnp.float32)
                if not norm_before else None)
            # BatchNorm2d params (inference-mode with deterministic stats).
            self.gamma = 1.0 + 0.1 * jax.random.normal(
                k2, (out_channels,), dtype=jnp.float32)
            self.beta = 0.1 * jax.random.normal(
                k3, (out_channels,), dtype=jnp.float32)
            self.running_mean = 0.05 * jax.random.normal(
                k4, (out_channels,), dtype=jnp.float32)
            self.running_var = jnp.ones((out_channels,), dtype=jnp.float32)

    def __call__(self, x):
        # x: (N, Cin, H, W) -- PyTorch NCHW layout at the boundary.
        if self.in_channels != self.out_channels:
            N, C, H, W = x.shape
            x3 = x.reshape(N, C, H * W)          # free contiguous collapse
            cout = self.out_channels

            bn_scale = self.gamma / jnp.sqrt(self.running_var + self.eps)
            bn_shift = self.beta - self.running_mean * bn_scale

            if self.norm_before:
                # conv -> BN -> relu: fold the BN scale into the weight rows;
                # only the shift enters the kernel. No post-activation affine.
                w_eff = self.w * bn_scale[:, None]
                pre = bn_shift
                post_scale = jnp.ones((cout,), jnp.float32)    # unused
                post_shift = jnp.zeros((cout,), jnp.float32)   # unused
                post_affine = False
            else:
                # conv(+bias) -> relu -> BN: cannot fold across the ReLU.
                w_eff = self.w
                pre = self.conv_bias
                post_scale = bn_scale
                post_shift = bn_shift
                post_affine = True

            y3 = conv1x1_affine_act(
                x3, w_eff.astype(self.compute_dtype),
                pre.reshape(cout, 1).astype(jnp.float32),
                post_scale.reshape(cout, 1).astype(jnp.float32),
                post_shift.reshape(cout, 1).astype(jnp.float32),
                post_affine=post_affine, out_dtype=x.dtype)
            x = y3.reshape(N, cout, H, W)        # free contiguous split

        if self.scale > 1:
            # Nearest-neighbour upsample: pure data movement, left to XLA as a
            # broadcast + contiguous reshape.
            # TODO(synk): fully fusing the upsample into the kernel's output
            # path needs an in-kernel (tile_h, W) un-flattening / interleaved
            # lane store; left unfused to keep the Mosaic lowering robust.
            s = int(self.scale)
            N, C, H, W = x.shape
            x = jnp.broadcast_to(x[:, :, :, None, :, None],
                                 (N, C, H, s, W, s)).reshape(N, C, H * s, W * s)
        return x


# -----------------------------------------------------------------------------
# Pure-JAX reference (mirrors the kernel's bf16 rounding of x and w)
# -----------------------------------------------------------------------------
def _reference(block, x):
    y = x
    if block.in_channels != block.out_channels:
        cd = block.compute_dtype
        bn_scale = block.gamma / jnp.sqrt(block.running_var + block.eps)
        bn_shift = block.beta - block.running_mean * bn_scale
        xq = x.astype(cd).astype(jnp.float32)
        if block.norm_before:
            # block.w is (Cout, Cin): einsum "oc,nchw->nohw" with o=Cout, c=Cin.
            w_eff = (block.w * bn_scale[:, None]).astype(cd).astype(jnp.float32)
            y = jnp.einsum("oc,nchw->nohw", w_eff, xq,
                           precision=jax.lax.Precision.HIGHEST)
            y = jnp.maximum(y + bn_shift[None, :, None, None], 0.0)
        else:
            w_eff = block.w.astype(cd).astype(jnp.float32)
            y = jnp.einsum("oc,nchw->nohw", w_eff, xq,
                           precision=jax.lax.Precision.HIGHEST)
            y = jnp.maximum(y + block.conv_bias[None, :, None, None], 0.0)
            y = (y * bn_scale[None, :, None, None]
                 + bn_shift[None, :, None, None])
    if block.scale > 1:
        s = int(block.scale)
        y = jnp.repeat(jnp.repeat(y, s, axis=2), s, axis=3)
    return y.astype(x.dtype)


if __name__ == "__main__":
    key = jax.random.PRNGKey(0)
    kx, kp = jax.random.split(key)

    N, Cin, H, W = 2, 4, 16, 16
    Cout, scale = 8, 2

    x = jax.random.normal(kx, (N, Cin, H, W), dtype=jnp.float32)
    block = ResNetEndpointBlockPallas(Cin, Cout, scale, key=kp)

    out = jax.block_until_ready(block(x))
    ref = _reference(block, x)

    assert out.shape == (N, Cout, H * scale, W * scale), out.shape
    assert jnp.allclose(out, ref, atol=2e-4, rtol=2e-4), (
        "mismatch vs reference, max abs err = "
        + str(float(jnp.max(jnp.abs(out - ref)))))

    print("KERNEL_OK")
</pallas_src>

<mosaic_0001>
module attributes {stable_mosaic.version = 11 : i64} {
  func.func @_conv1x1_affine_act_kernel(%arg0: i32, %arg1: i32, %arg2: memref<1x4x256xf32, #tpu.memory_space<vmem>>, %arg3: memref<8x4xbf16, #tpu.memory_space<vmem>>, %arg4: memref<8x1xf32, #tpu.memory_space<vmem>>, %arg5: memref<8x1xf32, #tpu.memory_space<vmem>>, %arg6: memref<8x1xf32, #tpu.memory_space<vmem>>, %arg7: memref<1x8x256xf32, #tpu.memory_space<vmem>>) attributes {dimension_semantics = [#tpu.dimension_semantics<parallel>, #tpu.dimension_semantics<parallel>], iteration_bounds = array<i64: 2, 1>, scalar_prefetch = 0 : i64, scratch_operands = 0 : i64, tpu.core_type = #tpu.core_type<tc>, window_params = [{transform_indices = @transform_0, window_bounds = array<i64: 1, 4, 256>}, {pipeline_mode = #tpu.pipeline_mode<synchronous>, transform_indices = @transform_1, window_bounds = array<i64: 8, 4>}, {pipeline_mode = #tpu.pipeline_mode<synchronous>, transform_indices = @transform_2, window_bounds = array<i64: 8, 1>}, {pipeline_mode = #tpu.pipeline_mode<synchronous>, transform_indices = @transform_3, window_bounds = array<i64: 8, 1>}, {pipeline_mode = #tpu.pipeline_mode<synchronous>, transform_indices = @transform_4, window_bounds = array<i64: 8, 1>}, {transform_indices = @transform_5, window_bounds = array<i64: 1, 8, 256>}]} {
    %c0 = arith.constant 0 : index
    %c0_0 = arith.constant 0 : index
    %c0_1 = arith.constant 0 : index
    %0 = vector.load %arg2[%c0, %c0_0, %c0_1] : memref<1x4x256xf32, #tpu.memory_space<vmem>>, vector<1x4x256xf32>
    %1 = vector.shape_cast %0 : vector<1x4x256xf32> to vector<4x256xf32>
    %2 = arith.truncf %1 : vector<4x256xf32> to vector<4x256xbf16>
    %c0_2 = arith.constant 0 : index
    %c0_3 = arith.constant 0 : index
    %3 = vector.load %arg3[%c0_2, %c0_3] : memref<8x4xbf16, #tpu.memory_space<vmem>>, vector<8x4xbf16>
    %cst = arith.constant dense<0.000000e+00> : vector<8x256xf32>
    %4 = tpu.matmul %3, %2, %cst {dimension_numbers = #tpu.dot_dimension_numbers<[1], [0], [0], [1], [0, 0, 1, 1], [], []>} : vector<8x4xbf16>, vector<4x256xbf16>, vector<8x256xf32> -> vector<8x256xf32>
    %c0_4 = arith.constant 0 : index
    %c0_5 = arith.constant 0 : index
    %5 = vector.load %arg4[%c0_4, %c0_5] : memref<8x1xf32, #tpu.memory_space<vmem>>, vector<8x1xf32>
    %6 = vector.broadcast %5 : vector<8x1xf32> to vector<8x256xf32>
    %7 = arith.addf %4, %6 : vector<8x256xf32>
    %cst_6 = arith.constant 0.000000e+00 : f32
    %8 = vector.broadcast %cst_6 : f32 to vector<8x256xf32>
    %9 = arith.maximumf %7, %8 : vector<8x256xf32>
    %c0_7 = arith.constant 0 : index
    %c0_8 = arith.constant 0 : index
    %c0_9 = arith.constant 0 : index
    %10 = vector.load %arg7[%c0_7, %c0_8, %c0_9] : memref<1x8x256xf32, #tpu.memory_space<vmem>>, vector<1x8x256xf32>
    %11 = vector.shape_cast %10 : vector<1x8x256xf32> to vector<8x256xf32>
    %12 = vector.shape_cast %9 : vector<8x256xf32> to vector<1x8x256xf32>
    tpu.vector_store %arg7[%c0_7, %c0_8, %c0_9], %12 {strides = array<i32>} : memref<1x8x256xf32, #tpu.memory_space<vmem>>, vector<1x8x256xf32>,
    return
  }
  func.func @transform_0(%arg0: i32, %arg1: i32) -> (i32, i32, i32) {
    %c0_i32 = arith.constant 0 : i32
    %c0_i32_0 = arith.constant 0 : i32
    return %arg0, %c0_i32, %arg1 : i32, i32, i32
  }
  func.func @transform_1(%arg0: i32, %arg1: i32) -> (i32, i32) {
    %c0_i32 = arith.constant 0 : i32
    %c0_i32_0 = arith.constant 0 : i32
    %c0_i32_1 = arith.constant 0 : i32
    return %c0_i32, %c0_i32_0 : i32, i32
  }
  func.func @transform_2(%arg0: i32, %arg1: i32) -> (i32, i32) {
    %c0_i32 = arith.constant 0 : i32
    %c0_i32_0 = arith.constant 0 : i32
    %c0_i32_1 = arith.constant 0 : i32
    return %c0_i32, %c0_i32_0 : i32, i32
  }
  func.func @transform_3(%arg0: i32, %arg1: i32) -> (i32, i32) {
    %c0_i32 = arith.constant 0 : i32
    %c0_i32_0 = arith.constant 0 : i32
    %c0_i32_1 = arith.constant 0 : i32
    return %c0_i32, %c0_i32_0 : i32, i32
  }
  func.func @transform_4(%arg0: i32, %arg1: i32) -> (i32, i32) {
    %c0_i32 = arith.constant 0 : i32
    %c0_i32_0 = arith.constant 0 : i32
    %c0_i32_1 = arith.constant 0 : i32
    return %c0_i32, %c0_i32_0 : i32, i32
  }
  func.func @transform_5(%arg0: i32, %arg1: i32) -> (i32, i32, i32) {
    %c0_i32 = arith.constant 0 : i32
    %c0_i32_0 = arith.constant 0 : i32
    return %arg0, %c0_i32, %arg1 : i32, i32, i32
  }
}

</mosaic_0001>

<llo_original>
// kernel: tpu_custom_call.1
$region0: #{tpu_custom_call.1}
  #allocation0 [shape = 'u32[]', space=smem, size = 0x4, offset = 0x4, fixed_abs, tag = 'smem constant byte address 0x4 - core index']
  #allocation1 [shape = 'u32[144,128]{1,0:T(1,128)}', space=vmem, size = 0x12000, scoped, tag = 'internal scratch']
  %s0 = inlined_call_operand.vmem [shape: f32[2,4,256], index: 0, kind: input, shape index: {}]
  %s1 = inlined_call_operand.vmem [shape: bf16[8,4], index: 1, kind: input, shape index: {}]
  %s2 = inlined_call_operand.vmem [shape: f32[8,1], index: 2, kind: input, shape index: {}]
  %s3 = inlined_call_operand.vmem [shape: f32[8,1], index: 3, kind: input, shape index: {}]
  %s4 = inlined_call_operand.vmem [shape: f32[8,1], index: 4, kind: input, shape index: {}]
  %s5 = inlined_call_operand.hbm [shape: f32[2,8,256], index: 5, kind: output, shape index: {}]
  %s6 = sld [smem:[#allocation0]]
  $region53: #{tpu_custom_call.1} parent=0
    _
  %s8 = ssub.s32 1, %s6
  %s9 = scalar_select 0, %s8, %s6
  $region1: #{tpu_custom_call.1} parent=0
    #allocation2 [shape = 'u8[16384]{0}', space=vmem, size = 0x4000, scoped, tag = 'output window, operand 0']
    #allocation3 [shape = 's32[2]{0}', space=sflag, size = 0x8, scoped, tag = 'scoped memory for tpu_custom_call.1']
    %10 = vsyncpa [#allocation3], 0
    %s11 = scalar_lea.sflag [#allocation3], 1
    %12 = vsyncpa %s11, 0
    loop: start=0, step=1, limit=4
    $region2: #{tpu_custom_call.1} parent=1 // loop_pre_header
      _
    $region3: #{tpu_custom_call.1} parent=1 // loop_header
      %s14 = sphi 0, %s18
      %p15 = scmp.ge.s32.totalorder %s14, 4
      %s21 = sphi 0, %s33
      %s22 = sphi 0, %s29
      %s23 = sphi 0, %s21
      %s24 = sphi 0, %s22
      %s25 = sphi 0, %s23
      %s26 = sphi 0, %s24
      %s38 = sphi 0, %s40
      %s41 = sphi 0, %s38
      %s42 = sphi 0, %s41
      %s58 = sphi 0, %s42
      %s62 = sphi 0, %s62
      %s64 = sphi 0, %s62
      %s65 = sphi 0, %s64
      %s79 = sphi 0, %s65
      %s83 = sphi 0, %s83
      %s85 = sphi 0, %s83
      %s86 = sphi 0, %s85
      %s100 = sphi 0, %s86
      %s104 = sphi 0, %s104
      %s106 = sphi 0, %s104
      %s107 = sphi 0, %s106
      %s121 = sphi 0, %s107
      %s125 = sphi 0, %s125
      %s127 = sphi 0, %s125
      %s128 = sphi 0, %s127
      %s142 = sphi 0, %s128
      %s150 = sphi 0, %s152
      %s153 = sphi 0, %s150
      %s154 = sphi 0, %s153
      %s170 = sphi 0, %s154
    $region4: #{tpu_custom_call.1} parent=1 // loop_header_branch
      %17 = sbr.rel (%p15) target = $region8
    $region5: #{tpu_custom_call.1} parent=1 // loop_body
      %s19 = ssub.s32 %s14, 1
      %s20 = ssub.s32 %s14, 2
      %s27 = sadd.s32 1, %s22
      %p28 = scmp.ge.s32.totalorder %s27, 1
      %s29 = scalar_select %p28, 0, %s27
      %s30 = sadd.s32 1, %s21
      %s31 = scalar_select %p28, %s30, %s21
      %p32 = scmp.ge.s32.totalorder %s31, 2
      %s33 = scalar_select %p32, 0, %s31
      %s34 = ssub.s32 %s21, %s33
      %s35 = ssub.s32 %s22, %s29
      %s36 = sor.u32 %s34, %s35
      %p37 = scmp.eq.s32.totalorder %s36, 0
      %s39 = sadd.s32 %s38, 1
      %s40 = scalar_select %p37, %s38, %s39
      %p43 = pneg %p37
      %p44 = scmp.eq.s32.totalorder %s14, 1
      %p45 = por %p43, %p44
      %p46 = scmp.ne.s32.totalorder %s38, %s41
      %p47 = scmp.eq.s32.totalorder %s14, 0
      %p48 = por %p46, %p47
      %p49 = scmp.ne.s32.totalorder %s38, %s41
      %p50 = scmp.eq.s32.totalorder %s19, 1
      %p51 = por %p49, %p50
      %p52 = scmp.ne.s32.totalorder %s41, %s42
      %p53 = scmp.eq.s32.totalorder %s19, 0
      %p54 = por %p52, %p53
      %p55 = scmp.ne.s32.totalorder %s41, %s42
      %p56 = scmp.eq.s32.totalorder %s20, 1
      %p57 = por %p55, %p56
      %p59 = scmp.ne.s32.totalorder %s42, %s58
      %p60 = scmp.eq.s32.totalorder %s20, 0
      %p61 = por %p59, %p60
      %s63 = sadd.s32 %s62, 1
      %p66 = scmp.eq.s32.totalorder %s14, 1
      %p67 = scmp.ne.s32.totalorder %s62, %s64
      %p68 = scmp.eq.s32.totalorder %s14, 0
      %p69 = por %p67, %p68
      %p70 = scmp.ne.s32.totalorder %s62, %s64
      %p71 = scmp.eq.s32.totalorder %s19, 1
      %p72 = por %p70, %p71
      %p73 = scmp.ne.s32.totalorder %s64, %s65
      %p74 = scmp.eq.s32.totalorder %s19, 0
      %p75 = por %p73, %p74
      %p76 = scmp.ne.s32.totalorder %s64, %s65
      %p77 = scmp.eq.s32.totalorder %s20, 1
      %p78 = por %p76, %p77
      %p80 = scmp.ne.s32.totalorder %s65, %s79
      %p81 = scmp.eq.s32.totalorder %s20, 0
      %p82 = por %p80, %p81
      %s84 = sadd.s32 %s83, 1
      %p87 = scmp.eq.s32.totalorder %s14, 1
      %p88 = scmp.ne.s32.totalorder %s83, %s85
      %p89 = scmp.eq.s32.totalorder %s14, 0
      %p90 = por %p88, %p89
      %p91 = scmp.ne.s32.totalorder %s83, %s85
      %p92 = scmp.eq.s32.totalorder %s19, 1
      %p93 = por %p91, %p92
      %p94 = scmp.ne.s32.totalorder %s85, %s86
      %p95 = scmp.eq.s32.totalorder %s19, 0
      %p96 = por %p94, %p95
      %p97 = scmp.ne.s32.totalorder %s85, %s86
      %p98 = scmp.eq.s32.totalorder %s20, 1
      %p99 = por %p97, %p98
      %p101 = scmp.ne.s32.totalorder %s86, %s100
      %p102 = scmp.eq.s32.totalorder %s20, 0
      %p103 = por %p101, %p102
      %s105 = sadd.s32 %s104, 1
      %p108 = scmp.eq.s32.totalorder %s14, 1
      %p109 = scmp.ne.s32.totalorder %s104, %s106
      %p110 = scmp.eq.s32.totalorder %s14, 0
      %p111 = por %p109, %p110
      %p112 = scmp.ne.s32.totalorder %s104, %s106
      %p113 = scmp.eq.s32.totalorder %s19, 1
      %p114 = por %p112, %p113
      %p115 = scmp.ne.s32.totalorder %s106, %s107
      %p116 = scmp.eq.s32.totalorder %s19, 0
      %p117 = por %p115, %p116
      %p118 = scmp.ne.s32.totalorder %s106, %s107
      %p119 = scmp.eq.s32.totalorder %s20, 1
      %p120 = por %p118, %p119
      %p122 = scmp.ne.s32.totalorder %s107, %s121
      %p123 = scmp.eq.s32.totalorder %s20, 0
      %p124 = por %p122, %p123
      %s126 = sadd.s32 %s125, 1
      %p129 = scmp.eq.s32.totalorder %s14, 1
      %p130 = scmp.ne.s32.totalorder %s125, %s127
      %p131 = scmp.eq.s32.totalorder %s14, 0
      %p132 = por %p130, %p131
      %p133 = scmp.ne.s32.totalorder %s125, %s127
      %p134 = scmp.eq.s32.totalorder %s19, 1
      %p135 = por %p133, %p134
      %p136 = scmp.ne.s32.totalorder %s127, %s128
      %p137 = scmp.eq.s32.totalorder %s19, 0
      %p138 = por %p136, %p137
      %p139 = scmp.ne.s32.totalorder %s127, %s128
      %p140 = scmp.eq.s32.totalorder %s20, 1
      %p141 = por %p139, %p140
      %p143 = scmp.ne.s32.totalorder %s128, %s142
      %p144 = scmp.eq.s32.totalorder %s20, 0
      %p145 = por %p143, %p144
      %s146 = ssub.s32 %s21, %s33
      %s147 = ssub.s32 %s22, %s29
      %s148 = sor.u32 %s146, %s147
      %p149 = scmp.eq.s32.totalorder %s148, 0
      %s151 = sadd.s32 %s150, 1
      %s152 = scalar_select %p149, %s150, %s151
      %p155 = pneg %p149
      %p156 = scmp.eq.s32.totalorder %s14, 1
      %p157 = por %p155, %p156
      %p158 = scmp.ne.s32.totalorder %s150, %s153
      %p159 = scmp.eq.s32.totalorder %s14, 0
      %p160 = por %p158, %p159
      %p161 = scmp.ne.s32.totalorder %s150, %s153
      %p162 = scmp.eq.s32.totalorder %s19, 1
      %p163 = por %p161, %p162
      %p164 = scmp.ne.s32.totalorder %s153, %s154
      %p165 = scmp.eq.s32.totalorder %s19, 0
      %p166 = por %p164, %p165
      %p167 = scmp.ne.s32.totalorder %s153, %s154
      %p168 = scmp.eq.s32.totalorder %s20, 1
      %p169 = por %p167, %p168
      %p171 = scmp.ne.s32.totalorder %s154, %s170
      %p172 = scmp.eq.s32.totalorder %s20, 0
      %p173 = por %p171, %p172
      %p174 = scmp.le.s32.totalorder 1, %s14
      %p175 = scmp.lt.s32.totalorder %s14, 3
      %p176 = pnand %p174, %p175
      %p177 = pneg %p176
      // Predicated region
      $region9: #{tpu_custom_call.1} parent=5 // pred_check
        _
      $region10: #{tpu_custom_call.1} parent=5 // pred_check_branch
        %179 = sbr.rel (%p176) target = $region12
      $region11: #{tpu_custom_call.1} parent=5 // pred_region
        %s180 = ssub.s32 %s14, 1
        // Predicated region
        $region13: #{tpu_custom_call.1} parent=11 // pred_check
          %p181 = pneg %p75
        $region14: #{tpu_custom_call.1} parent=11 // pred_check_branch
          %183 = sbr.rel (%p181) target = $region16
        $region15: #{tpu_custom_call.1} parent=11 // pred_region
          _
        $region16: #{tpu_custom_call.1} parent=11 // pred_fallthru
          _
        // Predicated region
        $region17: #{tpu_custom_call.1} parent=11 // pred_check
          %p184 = pneg %p96
        $region18: #{tpu_custom_call.1} parent=11 // pred_check_branch
          %186 = sbr.rel (%p184) target = $region20
        $region19: #{tpu_custom_call.1} parent=11 // pred_region
          _
        $region20: #{tpu_custom_call.1} parent=11 // pred_fallthru
          _
        // Predicated region
        $region21: #{tpu_custom_call.1} parent=11 // pred_check
          %p187 = pneg %p117
        $region22: #{tpu_custom_call.1} parent=11 // pred_check_branch
          %189 = sbr.rel (%p187) target = $region24
        $region23: #{tpu_custom_call.1} parent=11 // pred_region
          _
        $region24: #{tpu_custom_call.1} parent=11 // pred_fallthru
          _
        // Predicated region
        $region25: #{tpu_custom_call.1} parent=11 // pred_check
          %p190 = pneg %p138
        $region26: #{tpu_custom_call.1} parent=11 // pred_check_branch
          %192 = sbr.rel (%p190) target = $region28
        $region27: #{tpu_custom_call.1} parent=11 // pred_region
          _
        $region28: #{tpu_custom_call.1} parent=11 // pred_fallthru
          _
      $region12: #{tpu_custom_call.1} parent=5 // pred_fallthru
        _
      %p193 = scmp.lt.s32.totalorder %s14, 2
      // Predicated region
      $region29: #{tpu_custom_call.1} parent=5 // pred_check
        %p194 = pneg %p193
      $region30: #{tpu_custom_call.1} parent=5 // pred_check_branch
        %196 = sbr.rel (%p194) target = $region32
      $region31: #{tpu_custom_call.1} parent=5 // pred_region
        // Predicated region
        $region33: #{tpu_custom_call.1} parent=31 // pred_check
          %p197 = pneg %p48
        $region34: #{tpu_custom_call.1} parent=31 // pred_check_branch
          %199 = sbr.rel (%p197) target = $region36
        $region35: #{tpu_custom_call.1} parent=31 // pred_region
          %s200 = smul.u32 2, %s22
          %p201 = scmp.lt.s32.totalorder %s21, 1
          %s202 = scalar_select %p201, %s21, 1
          %p203 = scmp.lt.s32.totalorder %s200, 1
          %s204 = scalar_select %p203, %s200, 1
          %s205 = smul.addr %s202, 2
          %s206 = sadd.s32 %s204, %s205
          %s207 = smul.addr %s206, 4
          %s208 = scalar_lea.vmem %s0, %s207
          %s209 = smul.u32 2, %s22
        $region36: #{tpu_custom_call.1} parent=31 // pred_fallthru
          _
      $region32: #{tpu_custom_call.1} parent=5 // pred_fallthru
        _
      %p210 = scmp.le.s32.totalorder 1, %s14
      %p211 = scmp.lt.s32.totalorder %s14, 3
      %p212 = pnand %p210, %p211
      %p213 = pneg %p212
      // Predicated region
      $region37: #{tpu_custom_call.1} parent=5 // pred_check
        _
      $region38: #{tpu_custom_call.1} parent=5 // pred_check_branch
        %215 = sbr.rel (%p212) target = $region40
      $region39: #{tpu_custom_call.1} parent=5 // pred_region
        %s216 = ssub.s32 %s14, 1
        %s217 = smul.u32 2, %s24
        %p218 = scmp.lt.s32.totalorder %s23, 1
        %s219 = scalar_select %p218, %s23, 1
        %p220 = scmp.lt.s32.totalorder %s217, 1
        %s221 = scalar_select %p220, %s217, 1
        %s222 = smul.addr %s219, 2
        %s223 = sadd.s32 %s221, %s222
        %s224 = smul.addr %s223, 4
        %s225 = scalar_lea.vmem %s0, %s224
        %p226 = pneg %p54
        %p227 = pneg %p51
        %p228 = pneg %p75
        %p229 = pneg %p72
        %p230 = pneg %p96
        %p231 = pneg %p93
        %p232 = pneg %p117
        %p233 = pneg %p114
        %p234 = pneg %p138
        %p235 = pneg %p135
        %p236 = pneg %p166
        %p237 = pneg %p163
        %s238 = sand.u32 %s153, 1
        %s239 = scalar_lea.sflag [#allocation3], %s238
        %s240 = sand.u32 %s153, 1
        %s241 = smul.addr %s240, 16
        %s242 = scalar_lea.vmem [#allocation2], %s241
        %s243 = smul.u32 2, %s24
        %p244 = scmp.lt.s32.totalorder %s23, 1
        %s245 = scalar_select %p244, %s23, 1
        %p246 = scmp.lt.s32.totalorder %s243, 1
        %s247 = scalar_select %p246, %s243, 1
        %s248 = smul.addr %s245, 2
        %s249 = sadd.s32 %s247, %s248
        %s250 = smul.addr %s249, 4
        %s251 = scalar_lea.vmem %s0, %s250
        %s252 = smul.u32 2, %s24
        %s253 = smul.u32 2, %s24
        %v255 = vld [vmem:[%s251] sm:$0xff]
        %v257 = vcombine.high %v255, %v255
        %v259 = vpack.c.bf16 %v255, %v255
        %v260 = vpack.c.bf16 %v257, %v257
        %v261 = vld [vmem:[%s1] sm:$0xf]
        %v262 = vld [vmem:[%s2] sm:$0xff]
        %264 = vset.pattern.permute.xlu0 0
        %265 = vperm.xlu0 %264, %v262
        %v266 = vpop.permute.xlu0 %265
        %vm268 = vcmask 31744
        %v270 = vsel %vm268, %v261, 0
        %vm272 = vcmask 1041408
        %v274 = vsel %vm272, %v259, 0
        %v277 = vsel %vm272, %v260, 0
        %279 = vmatprep.subr.bf16.mxu0 %v277
        %280 = vmatpush1.bf16.msra.mxu0 %v274
        %281 = vmatprep.subr.bf16.mxu0 0
        %282 = vmatpush1.bf16.msra.mxu0 0
        %283 = vmatprep.subr.bf16.mxu0 0
        %284 = vmatpush1.bf16.msra.mxu0 0
        %285 = vmatprep.subr.bf16.mxu0 0
        %286 = vmatpush1.bf16.msra.mxu0 0
        %287 = vmatprep.subr.bf16.mxu0 0
        %288 = vmatpush1.bf16.msra.mxu0 0
        %289 = vmatprep.subr.bf16.mxu0 0
        %290 = vmatpush1.bf16.msra.mxu0 0
        %291 = vmatprep.subr.bf16.mxu0 0
        %292 = vmatpush1.bf16.msra.mxu0 0
        %293 = vmatprep.subr.bf16.mxu0 0
        %294 = vmatpush1.bf16.msra.mxu0 0
        %295 = vmatprep.subr.bf16.mxu0 0
        %296 = vmatpush1.bf16.msra.mxu0 0
        %297 = vmatprep.subr.bf16.mxu0 0
        %298 = vmatpush1.bf16.msra.mxu0 0
        %299 = vmatprep.subr.bf16.mxu0 0
        %300 = vmatpush1.bf16.msra.mxu0 0
        %301 = vmatprep.subr.bf16.mxu0 0
        %302 = vmatpush1.bf16.msra.mxu0 0
        %303 = vmatprep.subr.bf16.mxu0 0
        %304 = vmatpush1.bf16.msra.mxu0 0
        %305 = vmatprep.subr.bf16.mxu0 0
        %306 = vmatpush1.bf16.msra.mxu0 0
        %307 = vmatprep.subr.bf16.mxu0 0
        %308 = vmatpush1.bf16.msra.mxu0 0
        %309 = vmatprep.subr.bf16.mxu0 0
        %310 = vmatpush1.bf16.msra.mxu0 0
        %311 = vmatprep.mubr.bf16.mxu0 0
        %312 = vmatmul.mubr.bf16.gmra.mrb[0].mxu0 %v270
        %v313 = vpop.f32.mrb[0].mxu0
        %v314 = vadd.f32 %v266, %v313
        %v315 = vpop.f32.mrb[0].mxu0
        %v316 = vadd.f32 %v266, %v315
        %v317 = vpop.f32.mrb[0].mxu0
        %v318 = vpop.f32.mrb[0].mxu0
        %319 = vdwg.mxu0
        %v320 = vmax.f32 %v314, 0.0
        %v321 = vmax.f32 %v316, 0.0
        %322 = vst [vmem:[%s242] sm:$0xff] %v320
        %323 = vst [vmem:[%s242 + $0x8] sm:$0xff] %v321
        %s324 = sand.u32 %s153, 1
        %s325 = scalar_lea.sflag [#allocation3], %s324
        %s326 = sand.u32 %s153, 1
        %s327 = smul.addr %s326, 16
        %s328 = scalar_lea.vmem [#allocation2], %s327
        // Predicated region
        $region41: #{tpu_custom_call.1} parent=39 // pred_check
          %p329 = pneg %p163
        $region42: #{tpu_custom_call.1} parent=39 // pred_check_branch
          %331 = sbr.rel (%p329) target = $region44
        $region43: #{tpu_custom_call.1} parent=39 // pred_region
          %s332 = smul.u32 2, %s24
          %s334 = ssub.s32 256, 256
          %335 = vsyncadd %s325, %s334
          %s336 = smul.addr %s23, 2
          %s337 = sadd.s32 %s332, %s336
          %s338 = smul.addr %s337, 128
          %s339 = scalar_lea.hbm %s5, %s338
          %s341 = sshll.u32 %s328, 4
          %s342 = int_to_ptr.vmem [resolvable:$true] %s341
          %344 = dma.vmem_to_hbm [thread:$0]  %s342, 256, %s339, %s325
        $region44: #{tpu_custom_call.1} parent=39 // pred_fallthru
          _
      $region40: #{tpu_custom_call.1} parent=5 // pred_fallthru
        _
      %p345 = scmp.le.s32.totalorder 2, %s14
      // Predicated region
      $region45: #{tpu_custom_call.1} parent=5 // pred_check
        %p346 = pneg %p345
      $region46: #{tpu_custom_call.1} parent=5 // pred_check_branch
        %348 = sbr.rel (%p346) target = $region48
      $region47: #{tpu_custom_call.1} parent=5 // pred_region
        %s349 = ssub.s32 %s14, 2
        // Predicated region
        $region49: #{tpu_custom_call.1} parent=47 // pred_check
          %p350 = pneg %p169
        $region50: #{tpu_custom_call.1} parent=47 // pred_check_branch
          %352 = sbr.rel (%p350) target = $region52
        $region51: #{tpu_custom_call.1} parent=47 // pred_region
          %s353 = sand.u32 %s154, 1
          %s354 = scalar_lea.sflag [#allocation3], %s353
          %s355 = sand.u32 %s154, 1
          %s356 = smul.addr %s355, 16
          %s357 = scalar_lea.vmem [#allocation2], %s356
          %358 = dma.done %s354, 256
        $region52: #{tpu_custom_call.1} parent=47 // pred_fallthru
          _
      $region48: #{tpu_custom_call.1} parent=5 // pred_fallthru
        _
    $region6: #{tpu_custom_call.1} parent=1 // loop_footer
      %s18 = sadd.s32 1, %s14
    $region7: #{tpu_custom_call.1} parent=1 // loop_footer_branch
      %13 = sbr.rel target = $region3
    $region8: #{tpu_custom_call.1} parent=1 // loop_exit
      _
    %359 = vsyncpa [#allocation3], 1
    %s360 = scalar_lea.sflag [#allocation3], 1
    %361 = vsyncpa %s360, 1

</llo_original>
